<compile_context>
chip_gen: v6e
topology: v6e:2x2x1
jax: 0.10.0
libtpu: 0.0.40
codegen_flags: <defaults>
</compile_context>

<pallas_src>
import functools

import jax
import jax.numpy as jnp
from jax.experimental import pallas as pl
from jax.experimental.pallas import tpu as pltpu

_LANES = 128
_NEG_SLOPE = 0.2  # matches nn.LeakyReLU(negative_slope=0.2)


def _native_sublanes(dtype):
    """Packed sublane count for one vreg row-group: 8 (4B), 16 (2B), 32 (1B)."""
    return max(8, 32 // jnp.dtype(dtype).itemsize)


def _round_up(v, m):
    return ((v + m - 1) // m) * m


def _plain_act(x, non_lin):
    """Plain-XLA activation (fast path / ragged tail)."""
    if non_lin == "relu":
        return jnp.maximum(x, jnp.zeros_like(x))
    slope = jnp.asarray(_NEG_SLOPE, dtype=x.dtype)
    # Valid for floating x and 0 <= slope <= 1: max(x, slope*x) == leaky_relu.
    return jnp.maximum(x, x * slope)


def _actfun_kernel(x_ref, o_ref, *, non_lin):
    x = x_ref[...]
    if non_lin == "relu":
        o_ref[...] = jnp.maximum(x, jnp.zeros_like(x))
    else:  # leakyrelu
        slope = jnp.asarray(_NEG_SLOPE, dtype=x.dtype)
        o_ref[...] = jnp.maximum(x, x * slope)


def _choose_block_rows(rows, sublanes, target_rows):
    """Pick a block row count: sublane-aligned, <= target, and splitting the
    array into >= 2 grid steps whenever there is enough work (v7x megacore)."""
    if rows <= sublanes:
        return rows  # full-extent block (allowed even if < native sublanes)
    br = max(sublanes, (target_rows // sublanes) * sublanes)
    if rows > 2 * sublanes:
        half = _round_up((rows + 1) // 2, sublanes)
        br = min(br, half)
    return min(br, _round_up(rows, sublanes))


def act_fun(x, non_lin="relu", *, block_bytes=2 * 1024 * 1024,
            min_pallas_elems=65536, in_place=False):
    """Elementwise activation matching ActFun.forward (any shape, e.g. NCHW)."""
    if non_lin not in ("relu", "leakyrelu"):
        raise ValueError(
            "Please specify a activation type from the set {relu,leakyrelu}"
        )
    if non_lin == "leakyrelu" and not jnp.issubdtype(x.dtype, jnp.floating):
        raise TypeError("leakyrelu requires a floating-point input dtype")

    orig_shape = x.shape
    n = x.size
    if n == 0:
        return x

    # Tiny tensors: a standalone Pallas launch costs more than the traffic.
    if n < min_pallas_elems:
        return _plain_act(x, non_lin)

    flat = jnp.ravel(x)
    n_main = (n // _LANES) * _LANES
    tail = n - n_main
    if n_main == 0:  # only reachable when min_pallas_elems is forced very low
        return _plain_act(x, non_lin)

    rows = n_main // _LANES
    sublanes = _native_sublanes(x.dtype)
    itemsize = jnp.dtype(x.dtype).itemsize
    target_rows = max(sublanes, block_bytes // (_LANES * itemsize))
    br = _choose_block_rows(rows, sublanes, target_rows)
    grid = (pl.cdiv(rows, br),)

    x2d = (flat if tail == 0 else flat[:n_main]).reshape(rows, _LANES)

    kernel = functools.partial(_actfun_kernel, non_lin=non_lin)
    out2d = pl.pallas_call(
        kernel,
        out_shape=jax.ShapeDtypeStruct((rows, _LANES), x.dtype),
        grid_spec=pl.GridSpec(
            grid=grid,
            in_specs=[pl.BlockSpec((br, _LANES), lambda i: (i, 0))],
            out_specs=pl.BlockSpec((br, _LANES), lambda i: (i, 0)),
        ),
        compiler_params=pltpu.CompilerParams(
            dimension_semantics=("parallel",)
        ),
        input_output_aliases=({0: 0} if in_place else {}),
    )(x2d)

    out_flat = out2d.reshape(-1)
    if tail:
        tail_out = _plain_act(flat[n_main:], non_lin)
        out_flat = jnp.concatenate([out_flat, tail_out])
    return out_flat.reshape(orig_shape)


if __name__ == "__main__":
    key = jax.random.PRNGKey(0)
    k0, k1, k2, k3 = jax.random.split(key, 4)

    def ref(x, non_lin):
        if non_lin == "relu":
            return jnp.maximum(x, jnp.zeros_like(x))
        return jnp.where(x >= 0, x, x * _NEG_SLOPE)

    # Primary small NCHW input (as after a conv). Default path hits the
    # plain-XLA fast path; also force the Pallas path to validate the kernel.
    x = jax.random.normal(k0, (2, 4, 16, 16), dtype=jnp.float32)
    for nl in ("relu", "leakyrelu"):
        y_fast = jax.block_until_ready(act_fun(x, nl))
        y_pallas = jax.block_until_ready(act_fun(x, nl, min_pallas_elems=0))
        assert y_fast.shape == x.shape and y_fast.dtype == x.dtype
        assert jnp.allclose(y_fast, ref(x, nl))
        assert jnp.allclose(y_pallas, ref(x, nl))

    # Larger 128-divisible input: multi-block, 2+ grid steps (megacore) path.
    x_big = jax.random.normal(k1, (2, 16, 128, 128), dtype=jnp.float32)
    y_big = jax.block_until_ready(act_fun(x_big, "relu"))
    assert jnp.allclose(y_big, ref(x_big, "relu"))

    # Large, non-128-divisible size: Pallas aligned prefix + plain-jnp tail.
    x_odd = jax.random.normal(k2, (3, 7, 61, 53), dtype=jnp.float32)
    y_odd = jax.block_until_ready(act_fun(x_odd, "leakyrelu"))
    assert y_odd.shape == x_odd.shape
    assert jnp.allclose(y_odd, ref(x_odd, "leakyrelu"))

    # bf16: dtype-aware native sublane tiling (16 packed rows per vreg).
    x_bf16 = jax.random.normal(k3, (2, 16, 128, 128), dtype=jnp.bfloat16)
    y_bf16 = jax.block_until_ready(act_fun(x_bf16, "leakyrelu"))
    assert y_bf16.dtype == jnp.bfloat16
    assert jnp.allclose(
        y_bf16.astype(jnp.float32),
        ref(x_bf16.astype(jnp.float32), "leakyrelu"),
        rtol=1e-2, atol=1e-2,
    )

    print("KERNEL_OK")
</pallas_src>

<mosaic_0001>
module attributes {stable_mosaic.version = 11 : i64} {
  func.func @_actfun_kernel(%arg0: i32, %arg1: memref<16x128xf32, #tpu.memory_space<vmem>>, %arg2: memref<16x128xf32, #tpu.memory_space<vmem>>) attributes {dimension_semantics = [#tpu.dimension_semantics<parallel>], iteration_bounds = array<i64: 1>, scalar_prefetch = 0 : i64, scratch_operands = 0 : i64, tpu.core_type = #tpu.core_type<tc>, window_params = [{transform_indices = @transform_0, window_bounds = array<i64: 16, 128>}, {transform_indices = @transform_1, window_bounds = array<i64: 16, 128>}]} {
    %c0 = arith.constant 0 : index
    %c0_0 = arith.constant 0 : index
    %0 = vector.load %arg1[%c0, %c0_0] : memref<16x128xf32, #tpu.memory_space<vmem>>, vector<16x128xf32>
    %cst = arith.constant 0.000000e+00 : f32
    %1 = vector.broadcast %cst : f32 to vector<16x128xf32>
    %2 = arith.maximumf %0, %1 : vector<16x128xf32>
    %c0_1 = arith.constant 0 : index
    %c0_2 = arith.constant 0 : index
    %3 = vector.load %arg2[%c0_1, %c0_2] : memref<16x128xf32, #tpu.memory_space<vmem>>, vector<16x128xf32>
    tpu.vector_store %arg2[%c0_1, %c0_2], %2 {strides = array<i32>} : memref<16x128xf32, #tpu.memory_space<vmem>>, vector<16x128xf32>,
    return
  }
  func.func @transform_0(%arg0: i32) -> (i32, i32) {
    %c0_i32 = arith.constant 0 : i32
    %c0_i32_0 = arith.constant 0 : i32
    return %arg0, %c0_i32 : i32, i32
  }
  func.func @transform_1(%arg0: i32) -> (i32, i32) {
    %c0_i32 = arith.constant 0 : i32
    %c0_i32_0 = arith.constant 0 : i32
    return %arg0, %c0_i32 : i32, i32
  }
}

</mosaic_0001>

<llo_original>
// kernel: tpu_custom_call.1
$region0: #{tpu_custom_call.1}
  #allocation0 [shape = 'u32[]', space=smem, size = 0x4, offset = 0x4, fixed_abs, tag = 'smem constant byte address 0x4 - core index']
  #allocation1 [shape = 'u32[144,128]{1,0:T(1,128)}', space=vmem, size = 0x12000, scoped, tag = 'internal scratch']
  %s0 = inlined_call_operand.hbm [shape: f32[16,128], index: 0, kind: input, shape index: {}]
  %s1 = inlined_call_operand.hbm [shape: f32[16,128], index: 1, kind: output, shape index: {}]
  %s2 = sld [smem:[#allocation0]]
  $region18: #{tpu_custom_call.1} parent=0
    _
  %s4 = ssub.s32 1, %s2
  %s5 = scalar_select 0, %s4, %s2
  $region1: #{tpu_custom_call.1} parent=0
    #allocation2 [shape = 'u8[8192]{0}', space=vmem, size = 0x2000, scoped, tag = 'input window, operand 0, single buffered']
    #allocation3 [shape = 's32[1]{0}', space=sflag, size = 0x4, scoped, tag = 'scoped memory for tpu_custom_call.1']
    #allocation4 [shape = 's32[1]{0}', space=sflag, size = 0x4, scoped, tag = 'scoped memory for tpu_custom_call.1']
    #allocation5 [shape = 'u8[8192]{0}', space=vmem, size = 0x2000, scoped, tag = 'output window, operand 0, single buffered']
    %6 = vsyncpa [#allocation3], 0
    %7 = vsyncpa [#allocation4], 0
    // Predicated region
    $region2: #{tpu_custom_call.1} parent=1 // pred_check
      _
    $region3: #{tpu_custom_call.1} parent=1 // pred_check_branch
      %9 = sbr.rel (0) target = $region5
    $region4: #{tpu_custom_call.1} parent=1 // pred_region
      %s11 = ssub.s32 256, 256
      %12 = vsyncadd [#allocation3], %s11
      %s13 = sshll.u32 [#allocation2], 4
      %s14 = int_to_ptr.vmem [resolvable:$true] %s13
      %19 = dma.hbm_to_vmem [thread:$0]  %s0, 256, %s14, [#allocation3], 128, 128, 8
    $region5: #{tpu_custom_call.1} parent=1 // pred_fallthru
      _
    // Predicated region
    $region6: #{tpu_custom_call.1} parent=1 // pred_check
      _
    $region7: #{tpu_custom_call.1} parent=1 // pred_check_branch
      %21 = sbr.rel (0) target = $region9
    $region8: #{tpu_custom_call.1} parent=1 // pred_region
      %22 = dma.done [#allocation3], 256
    $region9: #{tpu_custom_call.1} parent=1 // pred_fallthru
      _
    %v23 = vld [vmem:[#allocation2] sm:$0xff]
    %v24 = vld [vmem:[#allocation2 + $0x8] sm:$0xff]
    %v25 = vmax.f32 %v23, 0.0
    %v26 = vmax.f32 %v24, 0.0
    %27 = vst [vmem:[#allocation5] sm:$0xff] %v25
    %28 = vst [vmem:[#allocation5 + $0x8] sm:$0xff] %v26
    // Predicated region
    $region10: #{tpu_custom_call.1} parent=1 // pred_check
      _
    $region11: #{tpu_custom_call.1} parent=1 // pred_check_branch
      %30 = sbr.rel (0) target = $region13
    $region12: #{tpu_custom_call.1} parent=1 // pred_region
      %s32 = ssub.s32 256, 256
      %33 = vsyncadd [#allocation4], %s32
      %s34 = sshll.u32 [#allocation5], 4
      %s35 = int_to_ptr.vmem [resolvable:$true] %s34
      %40 = dma.vmem_to_hbm [thread:$0]  %s35, 256, %s1, [#allocation4], 128, 128, 8
    $region13: #{tpu_custom_call.1} parent=1 // pred_fallthru
      _
    // Predicated region
    $region14: #{tpu_custom_call.1} parent=1 // pred_check
      _
    $region15: #{tpu_custom_call.1} parent=1 // pred_check_branch
      %42 = sbr.rel (0) target = $region17
    $region16: #{tpu_custom_call.1} parent=1 // pred_region
      %43 = dma.done [#allocation4], 256
    $region17: #{tpu_custom_call.1} parent=1 // pred_fallthru
      _
    %44 = vsyncpa [#allocation3], 1
    %45 = vsyncpa [#allocation4], 1

</llo_original>
